<compile_context>
chip_gen: v7x
topology: tpu7x:2x2x1
jax: 0.10.0
libtpu: 0.0.40
codegen_flags: <defaults>
</compile_context>

<pallas_src>
import functools

import jax
import jax.numpy as jnp
from jax.experimental import pallas as pl
from jax.experimental.pallas import tpu as pltpu


# Tap offsets (oy, ox) of the 3x3 kernel, row-major.  Must match the weight
# flattening order in the wrapper.
_TAP_OFFSETS = tuple((oy, ox) for oy in (-1, 0, 1) for ox in (-1, 0, 1))


def basic_block_kernel(x_ref, w1_ref, b1_ref, w2_ref, b2_ref, mask_ref,
                       out_ref, xpad_ref, *col_scratch, W, use_im2col):
    # Block shapes (one image per grid step):
    #   x_ref    : (1, C, P)          P = H*W, channel-major flattened pixels
    #   w1_ref   : (9, C, C) main path / (C, 9*C) tiny-C path  (BN1 folded)
    #   b1_ref   : (C, 1)             BN1 bias
    #   w2_ref   : like w1_ref        (BN2 folded)
    #   b2_ref   : (C, 1)             BN2 bias
    #   mask_ref : (2, P)             column-bounds masks for ox = -1 / +1
    #   out_ref  : (1, C, P)
    #   xpad_ref : (C, P + 2*(W+1))   staging scratch with (W+1) lanes of halo
    #   col_scratch : ((9*C, P),) only in the tiny-C im2col path
    C = x_ref.shape[1]
    P = x_ref.shape[2]
    pad = W + 1

    # Zero the halo slack once per step (tiny: C x 2*(W+1) lanes).  Taps whose
    # source row is out of the image read this region, so it must be a real
    # zero -- this fixes the previous 0 * uninitialized-NaN hazard.
    slack = jnp.zeros((C, pad), jnp.float32)
    xpad_ref[:, 0:pad] = slack
    xpad_ref[:, pad + P:2 * pad + P] = slack

    x = x_ref[0]                       # (C, P) f32
    mask = mask_ref[...]               # (2, P) f32, loaded once

    def shifted_tap(t, oy, ox):
        off = pad + oy * W + ox
        tap = xpad_ref[:, off:off + P]
        if ox != 0:
            # Only the ox = +/-1 taps can wrap across row boundaries inside
            # the interior; row-OOB reads land in the zeroed slack instead.
            m = mask[0:1, :] if ox < 0 else mask[1:2, :]
            tap = tap * m
        return tap

    def conv3x3(v, w_ref):
        # Stage the activation into the interior of the padded scratch so
        # every shifted tap is a plain static lane slice.
        xpad_ref[:, pad:pad + P] = v

        if use_im2col:
            # Tiny-C path: fold the 9 taps into a single K = 9*C matmul so
            # the MXU contraction dim is not absurdly small.
            col_ref = col_scratch[0]
            for t, (oy, ox) in enumerate(_TAP_OFFSETS):
                col_ref[t * C:(t + 1) * C, :] = shifted_tap(t, oy, ox)
            return jnp.dot(w_ref[...], col_ref[...],
                           preferred_element_type=jnp.float32)

        # Main path (C >= 32): 9 accumulated K = C dots read directly off the
        # shifted staging slices -- no im2col round trip through VMEM.  On
        # v7x the partial-product accumulation can live in the MRB.
        acc = None
        for t, (oy, ox) in enumerate(_TAP_OFFSETS):
            part = jnp.dot(w_ref[t], shifted_tap(t, oy, ox),
                           preferred_element_type=jnp.float32)
            acc = part if acc is None else acc + part
        return acc

    # conv1 (BN1 scale folded) -> BN1 bias -> ReLU
    h = jnp.maximum(conv3x3(x, w1_ref) + b1_ref[...], 0.0)
    # conv2 (BN2 scale folded) -> BN2 bias -> residual add -> ReLU
    o = conv3x3(h, w2_ref) + b2_ref[...] + x
    out_ref[0] = jnp.maximum(o, 0.0).astype(out_ref.dtype)


def fold_bn(gamma, beta, mean, var, eps=1e-5):
    scale = gamma / jnp.sqrt(var + eps)
    bias = beta - mean * scale
    return scale, bias


@jax.jit
def basic_block(x_nchw, w1, w2, bn1, bn2):
    """BasicBlock forward (stride=1, dilation=1, downsample=None).

    x_nchw : (N, C, H, W) float32 (PyTorch layout)
    w1, w2 : (C, C, 3, 3) conv weights (bias=False)
    bn1/bn2: dicts of gamma/beta/mean/var, each (C,)
    Returns (N, C, H, W) float32.
    """
    N, Cin, H, W = x_nchw.shape
    Cout = w1.shape[0]
    assert Cin == Cout, "BasicBlock with downsample=None requires Cin == Cout"
    C = Cin
    P = H * W

    # Fold BN scale into the bias-free conv weights; keep BN bias separate.
    s1, b1 = fold_bn(**bn1)
    s2, b2 = fold_bn(**bn2)
    w1s = w1.astype(jnp.float32) * s1[:, None, None, None]
    w2s = w2.astype(jnp.float32) * s2[:, None, None, None]

    use_im2col = C < 32
    if use_im2col:
        # (Cout,Cin,3,3) -> (Cout,ky,kx,Cin) -> (Cout, 9*Cin); K is tap-major,
        # matching the im2col row order.
        w1k = jnp.transpose(w1s, (0, 2, 3, 1)).reshape(C, 9 * C)
        w2k = jnp.transpose(w2s, (0, 2, 3, 1)).reshape(C, 9 * C)
        w_block = (C, 9 * C)
        w_imap = lambda n: (0, 0)
    else:
        # (Cout,Cin,3,3) -> (ky,kx,Cout,Cin) -> (9, Cout, Cin): one (C, C)
        # weight tile per tap for the 9-dot accumulation path.
        w1k = jnp.transpose(w1s, (2, 3, 0, 1)).reshape(9, C, C)
        w2k = jnp.transpose(w2s, (2, 3, 0, 1)).reshape(9, C, C)
        w_block = (9, C, C)
        w_imap = lambda n: (0, 0, 0)

    b1c = b1.reshape(C, 1).astype(jnp.float32)
    b2c = b2.reshape(C, 1).astype(jnp.float32)

    # Column-bounds masks for the ox = -1 / +1 taps only (row-bound taps are
    # handled by the zeroed halo slack in the kernel).
    xcol = jnp.tile(jnp.arange(W), H)                       # (P,) x coordinate
    mask = jnp.stack([xcol >= 1, xcol <= W - 2], axis=0).astype(jnp.float32)

    # NCHW -> (N, C, H*W): contiguous reshape -- no transpose, no pad, no copy.
    x3 = x_nchw.astype(jnp.float32).reshape(N, C, P)

    scratch = [pltpu.VMEM((C, P + 2 * (W + 1)), jnp.float32)]
    if use_im2col:
        scratch.append(pltpu.VMEM((9 * C, P), jnp.float32))

    # Explicit scoped-VMEM limit sized from the actual working set (with 2x
    # headroom), so production-sized C/H/W are not forced into tiny tiles by
    # the 16/32 MiB defaults.
    elt = 4
    block_bytes = C * P * elt
    weight_bytes = 9 * C * C * elt
    scratch_bytes = (C * (P + 2 * (W + 1)) * elt
                     + (9 * C * P * elt if use_im2col else 0))
    working_set = (2 * block_bytes                # x, double-buffered
                   + 2 * block_bytes              # out, double-buffered
                   + 2 * 2 * weight_bytes         # w1, w2 (TODO: Buffered(1))
                   + 2 * (2 * C + 2 * P) * elt    # biases + mask
                   + scratch_bytes)
    vmem_limit = int(min(max(2 * working_set, 16 * 1024 * 1024),
                         64 * 1024 * 1024))

    flops = N * 2 * 2 * 9 * C * C * P             # two convs, K = 9*C
    bytes_accessed = elt * (2 * N * C * P + 2 * 9 * C * C + 2 * C + 2 * P)

    kernel = functools.partial(basic_block_kernel, W=W, use_im2col=use_im2col)
    out3 = pl.pallas_call(
        kernel,
        out_shape=jax.ShapeDtypeStruct((N, C, P), jnp.float32),
        grid_spec=pltpu.PrefetchScalarGridSpec(
            num_scalar_prefetch=0,
            grid=(N,),            # one image per step; steps are independent
            in_specs=[
                pl.BlockSpec((1, C, P), lambda n: (n, 0, 0)),
                pl.BlockSpec(w_block, w_imap),
                pl.BlockSpec((C, 1), lambda n: (0, 0)),
                pl.BlockSpec(w_block, w_imap),
                pl.BlockSpec((C, 1), lambda n: (0, 0)),
                pl.BlockSpec((2, P), lambda n: (0, 0)),
            ],
            out_specs=pl.BlockSpec((1, C, P), lambda n: (n, 0, 0)),
            scratch_shapes=scratch,
        ),
        compiler_params=pltpu.CompilerParams(
            dimension_semantics=("parallel",),
            vmem_limit_bytes=vmem_limit),
        cost_estimate=pl.CostEstimate(
            flops=flops, transcendentals=0, bytes_accessed=bytes_accessed),
    )(x3, w1k, b1c, w2k, b2c, mask)

    # (N, C, H*W) -> NCHW: contiguous reshape, free.
    return out3.reshape(N, C, H, W)


def reference_basic_block(x_nchw, w1, w2, bn1, bn2):
    """Pure-JAX reference (lax conv) for the correctness check."""
    def conv(x, w):
        return jax.lax.conv_general_dilated(
            x, w, window_strides=(1, 1), padding=((1, 1), (1, 1)),
            dimension_numbers=("NCHW", "OIHW", "NCHW"))

    def bn(x, p):
        s, b = fold_bn(**p)
        return x * s[None, :, None, None] + b[None, :, None, None]

    out = jnp.maximum(bn(conv(x_nchw, w1), bn1), 0.0)
    out = bn(conv(out, w2), bn2) + x_nchw
    return jnp.maximum(out, 0.0)


def _make_params(key, N, C, H, W):
    k = jax.random.split(key, 8)
    x = jax.random.normal(k[0], (N, C, H, W), jnp.float32)
    w1 = jax.random.normal(k[1], (C, C, 3, 3), jnp.float32) * 0.1
    w2 = jax.random.normal(k[2], (C, C, 3, 3), jnp.float32) * 0.1
    bn1 = dict(gamma=1.0 + 0.1 * jax.random.normal(k[3], (C,), jnp.float32),
               beta=0.1 * jax.random.normal(k[4], (C,), jnp.float32),
               mean=0.05 * jnp.arange(C, dtype=jnp.float32),
               var=1.0 + 0.1 * jnp.arange(C, dtype=jnp.float32))
    bn2 = dict(gamma=1.0 + 0.1 * jax.random.normal(k[5], (C,), jnp.float32),
               beta=0.1 * jax.random.normal(k[6], (C,), jnp.float32),
               mean=0.02 * jnp.arange(C, dtype=jnp.float32),
               var=1.0 + 0.05 * jnp.arange(C, dtype=jnp.float32))
    return x, w1, w2, bn1, bn2


if __name__ == "__main__":
    key = jax.random.PRNGKey(0)
    configs = [
        (2, 4, 16, 16),    # tiny-C fallback path (single K = 9*C matmul)
        (2, 32, 16, 16),   # main path (9 accumulated K = C dots, no im2col)
    ]
    for i, (N, C, H, W) in enumerate(configs):
        x, w1, w2, bn1, bn2 = _make_params(jax.random.fold_in(key, i),
                                           N, C, H, W)
        out = jax.block_until_ready(basic_block(x, w1, w2, bn1, bn2))
        ref = reference_basic_block(x, w1, w2, bn1, bn2)
        assert out.shape == (N, C, H, W), out.shape
        err = float(jnp.max(jnp.abs(out - ref)))
        assert bool(jnp.allclose(out, ref, atol=1e-3, rtol=1e-3)), \
            (N, C, H, W, err)

    print("KERNEL_OK")
</pallas_src>

<mosaic_0001>
module attributes {stable_mosaic.version = 11 : i64} {
  func.func @basic_block_kernel(%arg0: i32, %arg1: memref<1x4x256xf32, #tpu.memory_space<vmem>>, %arg2: memref<4x36xf32, #tpu.memory_space<vmem>>, %arg3: memref<4x1xf32, #tpu.memory_space<vmem>>, %arg4: memref<4x36xf32, #tpu.memory_space<vmem>>, %arg5: memref<4x1xf32, #tpu.memory_space<vmem>>, %arg6: memref<2x256xf32, #tpu.memory_space<vmem>>, %arg7: memref<1x4x256xf32, #tpu.memory_space<vmem>>, %arg8: memref<4x290xf32, #tpu.memory_space<vmem>>, %arg9: memref<36x256xf32, #tpu.memory_space<vmem>>) attributes {dimension_semantics = [#tpu.dimension_semantics<parallel>], iteration_bounds = array<i64: 2>, scalar_prefetch = 0 : i64, scratch_operands = 2 : i64, tpu.core_type = #tpu.core_type<tc>, window_params = [{transform_indices = @transform_0, window_bounds = array<i64: 1, 4, 256>}, {pipeline_mode = #tpu.pipeline_mode<synchronous>, transform_indices = @transform_1, window_bounds = array<i64: 4, 36>}, {pipeline_mode = #tpu.pipeline_mode<synchronous>, transform_indices = @transform_2, window_bounds = array<i64: 4, 1>}, {pipeline_mode = #tpu.pipeline_mode<synchronous>, transform_indices = @transform_3, window_bounds = array<i64: 4, 36>}, {pipeline_mode = #tpu.pipeline_mode<synchronous>, transform_indices = @transform_4, window_bounds = array<i64: 4, 1>}, {pipeline_mode = #tpu.pipeline_mode<synchronous>, transform_indices = @transform_5, window_bounds = array<i64: 2, 256>}, {transform_indices = @transform_6, window_bounds = array<i64: 1, 4, 256>}]} {
    %cst = arith.constant 0.000000e+00 : f32
    %0 = vector.broadcast %cst : f32 to vector<4x17xf32>
    %c0 = arith.constant 0 : index
    %c0_0 = arith.constant 0 : index
    %1 = vector.load %arg8[%c0, %c0_0] : memref<4x290xf32, #tpu.memory_space<vmem>>, vector<4x17xf32>
    tpu.vector_store %arg8[%c0, %c0_0], %0 {strides = array<i32>} : memref<4x290xf32, #tpu.memory_space<vmem>>, vector<4x17xf32>,
    %c0_1 = arith.constant 0 : index
    %c273 = arith.constant 273 : index
    %2 = vector.load %arg8[%c0_1, %c273] : memref<4x290xf32, #tpu.memory_space<vmem>>, vector<4x17xf32>
    tpu.vector_store %arg8[%c0_1, %c273], %0 {strides = array<i32>} : memref<4x290xf32, #tpu.memory_space<vmem>>, vector<4x17xf32>,
    %c0_2 = arith.constant 0 : index
    %c0_3 = arith.constant 0 : index
    %c0_4 = arith.constant 0 : index
    %3 = vector.load %arg1[%c0_2, %c0_3, %c0_4] : memref<1x4x256xf32, #tpu.memory_space<vmem>>, vector<1x4x256xf32>
    %4 = vector.shape_cast %3 : vector<1x4x256xf32> to vector<4x256xf32>
    %c0_5 = arith.constant 0 : index
    %c0_6 = arith.constant 0 : index
    %5 = vector.load %arg6[%c0_5, %c0_6] : memref<2x256xf32, #tpu.memory_space<vmem>>, vector<2x256xf32>
    %c0_7 = arith.constant 0 : index
    %c17 = arith.constant 17 : index
    %6 = vector.load %arg8[%c0_7, %c17] : memref<4x290xf32, #tpu.memory_space<vmem>>, vector<4x256xf32>
    tpu.vector_store %arg8[%c0_7, %c17], %4 {strides = array<i32>} : memref<4x290xf32, #tpu.memory_space<vmem>>, vector<4x256xf32>,
    %c0_8 = arith.constant 0 : index
    %c0_9 = arith.constant 0 : index
    %7 = vector.load %arg8[%c0_8, %c0_9] : memref<4x290xf32, #tpu.memory_space<vmem>>, vector<4x256xf32>
    %8 = vector.extract_strided_slice %5 {offsets = [0, 0], sizes = [1, 256], strides = [1, 1]} : vector<2x256xf32> to vector<1x256xf32>
    %9 = vector.broadcast %8 : vector<1x256xf32> to vector<4x256xf32>
    %10 = arith.mulf %7, %9 : vector<4x256xf32>
    %c0_10 = arith.constant 0 : index
    %c0_11 = arith.constant 0 : index
    %11 = vector.load %arg9[%c0_10, %c0_11] : memref<36x256xf32, #tpu.memory_space<vmem>>, vector<4x256xf32>
    tpu.vector_store %arg9[%c0_10, %c0_11], %10 {strides = array<i32>} : memref<36x256xf32, #tpu.memory_space<vmem>>, vector<4x256xf32>,
    %c0_12 = arith.constant 0 : index
    %c1 = arith.constant 1 : index
    %12 = vector.load %arg8[%c0_12, %c1] : memref<4x290xf32, #tpu.memory_space<vmem>>, vector<4x256xf32>
    %c4 = arith.constant 4 : index
    %c0_13 = arith.constant 0 : index
    %13 = vector.load %arg9[%c4, %c0_13] : memref<36x256xf32, #tpu.memory_space<vmem>>, vector<4x256xf32>
    tpu.vector_store %arg9[%c4, %c0_13], %12 {strides = array<i32>} : memref<36x256xf32, #tpu.memory_space<vmem>>, vector<4x256xf32>,
    %c0_14 = arith.constant 0 : index
    %c2 = arith.constant 2 : index
    %14 = vector.load %arg8[%c0_14, %c2] : memref<4x290xf32, #tpu.memory_space<vmem>>, vector<4x256xf32>
    %15 = vector.extract_strided_slice %5 {offsets = [1, 0], sizes = [1, 256], strides = [1, 1]} : vector<2x256xf32> to vector<1x256xf32>
    %16 = vector.broadcast %15 : vector<1x256xf32> to vector<4x256xf32>
    %17 = arith.mulf %14, %16 : vector<4x256xf32>
    %c8 = arith.constant 8 : index
    %c0_15 = arith.constant 0 : index
    %18 = vector.load %arg9[%c8, %c0_15] : memref<36x256xf32, #tpu.memory_space<vmem>>, vector<4x256xf32>
    tpu.vector_store %arg9[%c8, %c0_15], %17 {strides = array<i32>} : memref<36x256xf32, #tpu.memory_space<vmem>>, vector<4x256xf32>,
    %c0_16 = arith.constant 0 : index
    %c16 = arith.constant 16 : index
    %19 = vector.load %arg8[%c0_16, %c16] : memref<4x290xf32, #tpu.memory_space<vmem>>, vector<4x256xf32>
    %20 = vector.extract_strided_slice %5 {offsets = [0, 0], sizes = [1, 256], strides = [1, 1]} : vector<2x256xf32> to vector<1x256xf32>
    %21 = vector.broadcast %20 : vector<1x256xf32> to vector<4x256xf32>
    %22 = arith.mulf %19, %21 : vector<4x256xf32>
    %c12 = arith.constant 12 : index
    %c0_17 = arith.constant 0 : index
    %23 = vector.load %arg9[%c12, %c0_17] : memref<36x256xf32, #tpu.memory_space<vmem>>, vector<4x256xf32>
    tpu.vector_store %arg9[%c12, %c0_17], %22 {strides = array<i32>} : memref<36x256xf32, #tpu.memory_space<vmem>>, vector<4x256xf32>,
    %c0_18 = arith.constant 0 : index
    %c17_19 = arith.constant 17 : index
    %24 = vector.load %arg8[%c0_18, %c17_19] : memref<4x290xf32, #tpu.memory_space<vmem>>, vector<4x256xf32>
    %c16_20 = arith.constant 16 : index
    %c0_21 = arith.constant 0 : index
    %25 = vector.load %arg9[%c16_20, %c0_21] : memref<36x256xf32, #tpu.memory_space<vmem>>, vector<4x256xf32>
    tpu.vector_store %arg9[%c16_20, %c0_21], %24 {strides = array<i32>} : memref<36x256xf32, #tpu.memory_space<vmem>>, vector<4x256xf32>,
    %c0_22 = arith.constant 0 : index
    %c18 = arith.constant 18 : index
    %26 = vector.load %arg8[%c0_22, %c18] : memref<4x290xf32, #tpu.memory_space<vmem>>, vector<4x256xf32>
    %27 = vector.extract_strided_slice %5 {offsets = [1, 0], sizes = [1, 256], strides = [1, 1]} : vector<2x256xf32> to vector<1x256xf32>
    %28 = vector.broadcast %27 : vector<1x256xf32> to vector<4x256xf32>
    %29 = arith.mulf %26, %28 : vector<4x256xf32>
    %c20 = arith.constant 20 : index
    %c0_23 = arith.constant 0 : index
    %30 = vector.load %arg9[%c20, %c0_23] : memref<36x256xf32, #tpu.memory_space<vmem>>, vector<4x256xf32>
    tpu.vector_store %arg9[%c20, %c0_23], %29 {strides = array<i32>} : memref<36x256xf32, #tpu.memory_space<vmem>>, vector<4x256xf32>,
    %c0_24 = arith.constant 0 : index
    %c32 = arith.constant 32 : index
    %31 = vector.load %arg8[%c0_24, %c32] : memref<4x290xf32, #tpu.memory_space<vmem>>, vector<4x256xf32>
    %32 = vector.extract_strided_slice %5 {offsets = [0, 0], sizes = [1, 256], strides = [1, 1]} : vector<2x256xf32> to vector<1x256xf32>
    %33 = vector.broadcast %32 : vector<1x256xf32> to vector<4x256xf32>
    %34 = arith.mulf %31, %33 : vector<4x256xf32>
    %c24 = arith.constant 24 : index
    %c0_25 = arith.constant 0 : index
    %35 = vector.load %arg9[%c24, %c0_25] : memref<36x256xf32, #tpu.memory_space<vmem>>, vector<4x256xf32>
    tpu.vector_store %arg9[%c24, %c0_25], %34 {strides = array<i32>} : memref<36x256xf32, #tpu.memory_space<vmem>>, vector<4x256xf32>,
    %c0_26 = arith.constant 0 : index
    %c33 = arith.constant 33 : index
    %36 = vector.load %arg8[%c0_26, %c33] : memref<4x290xf32, #tpu.memory_space<vmem>>, vector<4x256xf32>
    %c28 = arith.constant 28 : index
    %c0_27 = arith.constant 0 : index
    %37 = vector.load %arg9[%c28, %c0_27] : memref<36x256xf32, #tpu.memory_space<vmem>>, vector<4x256xf32>
    tpu.vector_store %arg9[%c28, %c0_27], %36 {strides = array<i32>} : memref<36x256xf32, #tpu.memory_space<vmem>>, vector<4x256xf32>,
    %c0_28 = arith.constant 0 : index
    %c34 = arith.constant 34 : index
    %38 = vector.load %arg8[%c0_28, %c34] : memref<4x290xf32, #tpu.memory_space<vmem>>, vector<4x256xf32>
    %39 = vector.extract_strided_slice %5 {offsets = [1, 0], sizes = [1, 256], strides = [1, 1]} : vector<2x256xf32> to vector<1x256xf32>
    %40 = vector.broadcast %39 : vector<1x256xf32> to vector<4x256xf32>
    %41 = arith.mulf %38, %40 : vector<4x256xf32>
    %c32_29 = arith.constant 32 : index
    %c0_30 = arith.constant 0 : index
    %42 = vector.load %arg9[%c32_29, %c0_30] : memref<36x256xf32, #tpu.memory_space<vmem>>, vector<4x256xf32>
    tpu.vector_store %arg9[%c32_29, %c0_30], %41 {strides = array<i32>} : memref<36x256xf32, #tpu.memory_space<vmem>>, vector<4x256xf32>,
    %c0_31 = arith.constant 0 : index
    %c0_32 = arith.constant 0 : index
    %43 = vector.load %arg2[%c0_31, %c0_32] : memref<4x36xf32, #tpu.memory_space<vmem>>, vector<4x36xf32>
    %c0_33 = arith.constant 0 : index
    %c0_34 = arith.constant 0 : index
    %44 = vector.load %arg9[%c0_33, %c0_34] : memref<36x256xf32, #tpu.memory_space<vmem>>, vector<36x256xf32>
    %cst_35 = arith.constant dense<0.000000e+00> : vector<4x256xf32>
    %45 = tpu.matmul %43, %44, %cst_35 {dimension_numbers = #tpu.dot_dimension_numbers<[1], [0], [0], [1], [0, 0, 1, 1], [], []>} : vector<4x36xf32>, vector<36x256xf32>, vector<4x256xf32> -> vector<4x256xf32>
    %c0_36 = arith.constant 0 : index
    %c0_37 = arith.constant 0 : index
    %46 = vector.load %arg3[%c0_36, %c0_37] : memref<4x1xf32, #tpu.memory_space<vmem>>, vector<4x1xf32>
    %47 = vector.broadcast %46 : vector<4x1xf32> to vector<4x256xf32>
    %48 = arith.addf %45, %47 : vector<4x256xf32>
    %cst_38 = arith.constant 0.000000e+00 : f32
    %49 = vector.broadcast %cst_38 : f32 to vector<4x256xf32>
    %50 = arith.maximumf %48, %49 : vector<4x256xf32>
    %c0_39 = arith.constant 0 : index
    %c17_40 = arith.constant 17 : index
    %51 = vector.load %arg8[%c0_39, %c17_40] : memref<4x290xf32, #tpu.memory_space<vmem>>, vector<4x256xf32>
    tpu.vector_store %arg8[%c0_39, %c17_40], %50 {strides = array<i32>} : memref<4x290xf32, #tpu.memory_space<vmem>>, vector<4x256xf32>,
    %c0_41 = arith.constant 0 : index
    %c0_42 = arith.constant 0 : index
    %52 = vector.load %arg8[%c0_41, %c0_42] : memref<4x290xf32, #tpu.memory_space<vmem>>, vector<4x256xf32>
    %53 = vector.extract_strided_slice %5 {offsets = [0, 0], sizes = [1, 256], strides = [1, 1]} : vector<2x256xf32> to vector<1x256xf32>
    %54 = vector.broadcast %53 : vector<1x256xf32> to vector<4x256xf32>
    %55 = arith.mulf %52, %54 : vector<4x256xf32>
    %c0_43 = arith.constant 0 : index
    %c0_44 = arith.constant 0 : index
    %56 = vector.load %arg9[%c0_43, %c0_44] : memref<36x256xf32, #tpu.memory_space<vmem>>, vector<4x256xf32>
    tpu.vector_store %arg9[%c0_43, %c0_44], %55 {strides = array<i32>} : memref<36x256xf32, #tpu.memory_space<vmem>>, vector<4x256xf32>,
    %c0_45 = arith.constant 0 : index
    %c1_46 = arith.constant 1 : index
    %57 = vector.load %arg8[%c0_45, %c1_46] : memref<4x290xf32, #tpu.memory_space<vmem>>, vector<4x256xf32>
    %c4_47 = arith.constant 4 : index
    %c0_48 = arith.constant 0 : index
    %58 = vector.load %arg9[%c4_47, %c0_48] : memref<36x256xf32, #tpu.memory_space<vmem>>, vector<4x256xf32>
    tpu.vector_store %arg9[%c4_47, %c0_48], %57 {strides = array<i32>} : memref<36x256xf32, #tpu.memory_space<vmem>>, vector<4x256xf32>,
    %c0_49 = arith.constant 0 : index
    %c2_50 = arith.constant 2 : index
    %59 = vector.load %arg8[%c0_49, %c2_50] : memref<4x290xf32, #tpu.memory_space<vmem>>, vector<4x256xf32>
    %60 = vector.extract_strided_slice %5 {offsets = [1, 0], sizes = [1, 256], strides = [1, 1]} : vector<2x256xf32> to vector<1x256xf32>
    %61 = vector.broadcast %60 : vector<1x256xf32> to vector<4x256xf32>
    %62 = arith.mulf %59, %61 : vector<4x256xf32>
    %c8_51 = arith.constant 8 : index
    %c0_52 = arith.constant 0 : index
    %63 = vector.load %arg9[%c8_51, %c0_52] : memref<36x256xf32, #tpu.memory_space<vmem>>, vector<4x256xf32>
    tpu.vector_store %arg9[%c8_51, %c0_52], %62 {strides = array<i32>} : memref<36x256xf32, #tpu.memory_space<vmem>>, vector<4x256xf32>,
    %c0_53 = arith.constant 0 : index
    %c16_54 = arith.constant 16 : index
    %64 = vector.load %arg8[%c0_53, %c16_54] : memref<4x290xf32, #tpu.memory_space<vmem>>, vector<4x256xf32>
    %65 = vector.extract_strided_slice %5 {offsets = [0, 0], sizes = [1, 256], strides = [1, 1]} : vector<2x256xf32> to vector<1x256xf32>
    %66 = vector.broadcast %65 : vector<1x256xf32> to vector<4x256xf32>
    %67 = arith.mulf %64, %66 : vector<4x256xf32>
    %c12_55 = arith.constant 12 : index
    %c0_56 = arith.constant 0 : index
    %68 = vector.load %arg9[%c12_55, %c0_56] : memref<36x256xf32, #tpu.memory_space<vmem>>, vector<4x256xf32>
    tpu.vector_store %arg9[%c12_55, %c0_56], %67 {strides = array<i32>} : memref<36x256xf32, #tpu.memory_space<vmem>>, vector<4x256xf32>,
    %c0_57 = arith.constant 0 : index
    %c17_58 = arith.constant 17 : index
    %69 = vector.load %arg8[%c0_57, %c17_58] : memref<4x290xf32, #tpu.memory_space<vmem>>, vector<4x256xf32>
    %c16_59 = arith.constant 16 : index
    %c0_60 = arith.constant 0 : index
    %70 = vector.load %arg9[%c16_59, %c0_60] : memref<36x256xf32, #tpu.memory_space<vmem>>, vector<4x256xf32>
    tpu.vector_store %arg9[%c16_59, %c0_60], %69 {strides = array<i32>} : memref<36x256xf32, #tpu.memory_space<vmem>>, vector<4x256xf32>,
    %c0_61 = arith.constant 0 : index
    %c18_62 = arith.constant 18 : index
    %71 = vector.load %arg8[%c0_61, %c18_62] : memref<4x290xf32, #tpu.memory_space<vmem>>, vector<4x256xf32>
    %72 = vector.extract_strided_slice %5 {offsets = [1, 0], sizes = [1, 256], strides = [1, 1]} : vector<2x256xf32> to vector<1x256xf32>
    %73 = vector.broadcast %72 : vector<1x256xf32> to vector<4x256xf32>
    %74 = arith.mulf %71, %73 : vector<4x256xf32>
    %c20_63 = arith.constant 20 : index
    %c0_64 = arith.constant 0 : index
    %75 = vector.load %arg9[%c20_63, %c0_64] : memref<36x256xf32, #tpu.memory_space<vmem>>, vector<4x256xf32>
    tpu.vector_store %arg9[%c20_63, %c0_64], %74 {strides = array<i32>} : memref<36x256xf32, #tpu.memory_space<vmem>>, vector<4x256xf32>,
    %c0_65 = arith.constant 0 : index
    %c32_66 = arith.constant 32 : index
    %76 = vector.load %arg8[%c0_65, %c32_66] : memref<4x290xf32, #tpu.memory_space<vmem>>, vector<4x256xf32>
    %77 = vector.extract_strided_slice %5 {offsets = [0, 0], sizes = [1, 256], strides = [1, 1]} : vector<2x256xf32> to vector<1x256xf32>
    %78 = vector.broadcast %77 : vector<1x256xf32> to vector<4x256xf32>
    %79 = arith.mulf %76, %78 : vector<4x256xf32>
    %c24_67 = arith.constant 24 : index
    %c0_68 = arith.constant 0 : index
    %80 = vector.load %arg9[%c24_67, %c0_68] : memref<36x256xf32, #tpu.memory_space<vmem>>, vector<4x256xf32>
    tpu.vector_store %arg9[%c24_67, %c0_68], %79 {strides = array<i32>} : memref<36x256xf32, #tpu.memory_space<vmem>>, vector<4x256xf32>,
    %c0_69 = arith.constant 0 : index
    %c33_70 = arith.constant 33 : index
    %81 = vector.load %arg8[%c0_69, %c33_70] : memref<4x290xf32, #tpu.memory_space<vmem>>, vector<4x256xf32>
    %c28_71 = arith.constant 28 : index
    %c0_72 = arith.constant 0 : index
    %82 = vector.load %arg9[%c28_71, %c0_72] : memref<36x256xf32, #tpu.memory_space<vmem>>, vector<4x256xf32>
    tpu.vector_store %arg9[%c28_71, %c0_72], %81 {strides = array<i32>} : memref<36x256xf32, #tpu.memory_space<vmem>>, vector<4x256xf32>,
    %c0_73 = arith.constant 0 : index
    %c34_74 = arith.constant 34 : index
    %83 = vector.load %arg8[%c0_73, %c34_74] : memref<4x290xf32, #tpu.memory_space<vmem>>, vector<4x256xf32>
    %84 = vector.extract_strided_slice %5 {offsets = [1, 0], sizes = [1, 256], strides = [1, 1]} : vector<2x256xf32> to vector<1x256xf32>
    %85 = vector.broadcast %84 : vector<1x256xf32> to vector<4x256xf32>
    %86 = arith.mulf %83, %85 : vector<4x256xf32>
    %c32_75 = arith.constant 32 : index
    %c0_76 = arith.constant 0 : index
    %87 = vector.load %arg9[%c32_75, %c0_76] : memref<36x256xf32, #tpu.memory_space<vmem>>, vector<4x256xf32>
    tpu.vector_store %arg9[%c32_75, %c0_76], %86 {strides = array<i32>} : memref<36x256xf32, #tpu.memory_space<vmem>>, vector<4x256xf32>,
    %c0_77 = arith.constant 0 : index
    %c0_78 = arith.constant 0 : index
    %88 = vector.load %arg4[%c0_77, %c0_78] : memref<4x36xf32, #tpu.memory_space<vmem>>, vector<4x36xf32>
    %c0_79 = arith.constant 0 : index
    %c0_80 = arith.constant 0 : index
    %89 = vector.load %arg9[%c0_79, %c0_80] : memref<36x256xf32, #tpu.memory_space<vmem>>, vector<36x256xf32>
    %cst_81 = arith.constant dense<0.000000e+00> : vector<4x256xf32>
    %90 = tpu.matmul %88, %89, %cst_81 {dimension_numbers = #tpu.dot_dimension_numbers<[1], [0], [0], [1], [0, 0, 1, 1], [], []>} : vector<4x36xf32>, vector<36x256xf32>, vector<4x256xf32> -> vector<4x256xf32>
    %c0_82 = arith.constant 0 : index
    %c0_83 = arith.constant 0 : index
    %91 = vector.load %arg5[%c0_82, %c0_83] : memref<4x1xf32, #tpu.memory_space<vmem>>, vector<4x1xf32>
    %92 = vector.broadcast %91 : vector<4x1xf32> to vector<4x256xf32>
    %93 = arith.addf %90, %92 : vector<4x256xf32>
    %94 = arith.addf %93, %4 : vector<4x256xf32>
    %cst_84 = arith.constant 0.000000e+00 : f32
    %95 = vector.broadcast %cst_84 : f32 to vector<4x256xf32>
    %96 = arith.maximumf %94, %95 : vector<4x256xf32>
    %c0_85 = arith.constant 0 : index
    %c0_86 = arith.constant 0 : index
    %c0_87 = arith.constant 0 : index
    %97 = vector.load %arg7[%c0_85, %c0_86, %c0_87] : memref<1x4x256xf32, #tpu.memory_space<vmem>>, vector<1x4x256xf32>
    %98 = vector.shape_cast %97 : vector<1x4x256xf32> to vector<4x256xf32>
    %99 = vector.shape_cast %96 : vector<4x256xf32> to vector<1x4x256xf32>
    tpu.vector_store %arg7[%c0_85, %c0_86, %c0_87], %99 {strides = array<i32>} : memref<1x4x256xf32, #tpu.memory_space<vmem>>, vector<1x4x256xf32>,
    return
  }
  func.func @transform_0(%arg0: i32) -> (i32, i32, i32) {
    %c0_i32 = arith.constant 0 : i32
    %c0_i32_0 = arith.constant 0 : i32
    %c0_i32_1 = arith.constant 0 : i32
    return %arg0, %c0_i32, %c0_i32_0 : i32, i32, i32
  }
  func.func @transform_1(%arg0: i32) -> (i32, i32) {
    %c0_i32 = arith.constant 0 : i32
    %c0_i32_0 = arith.constant 0 : i32
    %c0_i32_1 = arith.constant 0 : i32
    return %c0_i32, %c0_i32_0 : i32, i32
  }
  func.func @transform_2(%arg0: i32) -> (i32, i32) {
    %c0_i32 = arith.constant 0 : i32
    %c0_i32_0 = arith.constant 0 : i32
    %c0_i32_1 = arith.constant 0 : i32
    return %c0_i32, %c0_i32_0 : i32, i32
  }
  func.func @transform_3(%arg0: i32) -> (i32, i32) {
    %c0_i32 = arith.constant 0 : i32
    %c0_i32_0 = arith.constant 0 : i32
    %c0_i32_1 = arith.constant 0 : i32
    return %c0_i32, %c0_i32_0 : i32, i32
  }
  func.func @transform_4(%arg0: i32) -> (i32, i32) {
    %c0_i32 = arith.constant 0 : i32
    %c0_i32_0 = arith.constant 0 : i32
    %c0_i32_1 = arith.constant 0 : i32
    return %c0_i32, %c0_i32_0 : i32, i32
  }
  func.func @transform_5(%arg0: i32) -> (i32, i32) {
    %c0_i32 = arith.constant 0 : i32
    %c0_i32_0 = arith.constant 0 : i32
    %c0_i32_1 = arith.constant 0 : i32
    return %c0_i32, %c0_i32_0 : i32, i32
  }
  func.func @transform_6(%arg0: i32) -> (i32, i32, i32) {
    %c0_i32 = arith.constant 0 : i32
    %c0_i32_0 = arith.constant 0 : i32
    %c0_i32_1 = arith.constant 0 : i32
    return %arg0, %c0_i32, %c0_i32_0 : i32, i32, i32
  }
}

</mosaic_0001>

<llo_original>
// kernel: basic_block.1
$region0: #{basic_block.1}
  #allocation0 [shape = 'u32[]', space=smem, size = 0x4, offset = 0x4, fixed_abs, tag = 'smem constant byte address 0x4 - core index']
  #allocation1 [shape = 'u32[144,128]{1,0:T(1,128)}', space=vmem, size = 0x12000, scoped, tag = 'internal scratch']
  #allocation2 [shape = 'f32[4,290]{1,0:T(4,128)}', space=vmem, size = 0x1800, scoped, tag = 'scratch operand']
  #allocation3 [shape = 'f32[36,256]{1,0:T(8,128)}', space=vmem, size = 0xa000, scoped, tag = 'scratch operand']
  %s0 = inlined_call_operand.vmem [shape: f32[2,4,256], index: 0, kind: input, shape index: {}]
  %s1 = inlined_call_operand.vmem [shape: f32[4,36], index: 1, kind: input, shape index: {}]
  %s2 = inlined_call_operand.vmem [shape: f32[4,1], index: 2, kind: input, shape index: {}]
  %s3 = inlined_call_operand.vmem [shape: f32[4,36], index: 3, kind: input, shape index: {}]
  %s4 = inlined_call_operand.vmem [shape: f32[4,1], index: 4, kind: input, shape index: {}]
  %s5 = inlined_call_operand.vmem [shape: f32[2,256], index: 5, kind: input, shape index: {}]
  %s6 = inlined_call_operand.vmem [shape: f32[2,4,256], index: 6, kind: output, shape index: {}]
  %s7 = sld [smem:[#allocation0]]
  $region57: #{basic_block.1} parent=0
    _
  %s9 = ssub.s32 1, %s7
  %s10 = scalar_select 0, %s9, %s7
  loop: start=0, step=1, limit=4
  $region2: #{basic_block.1} parent=0 // loop_pre_header
    _
  $region3: #{basic_block.1} parent=0 // loop_header
    %s12 = sphi 0, %s16
    %p13 = scmp.ge.s32.totalorder %s12, 4
    %s22 = sphi 0, %s24
    %s25 = sphi 0, %s22
    %s26 = sphi 0, %s25
    %s42 = sphi 0, %s26
    %s46 = sphi 0, %s46
    %s48 = sphi 0, %s46
    %s49 = sphi 0, %s48
    %s63 = sphi 0, %s49
    %s67 = sphi 0, %s67
    %s69 = sphi 0, %s67
    %s70 = sphi 0, %s69
    %s84 = sphi 0, %s70
    %s88 = sphi 0, %s88
    %s90 = sphi 0, %s88
    %s91 = sphi 0, %s90
    %s105 = sphi 0, %s91
    %s109 = sphi 0, %s109
    %s111 = sphi 0, %s109
    %s112 = sphi 0, %s111
    %s126 = sphi 0, %s112
    %s130 = sphi 0, %s130
    %s132 = sphi 0, %s130
    %s133 = sphi 0, %s132
    %s147 = sphi 0, %s133
    %s153 = sphi 0, %s155
    %s156 = sphi 0, %s153
    %s157 = sphi 0, %s156
    %s173 = sphi 0, %s157
  $region4: #{basic_block.1} parent=0 // loop_header_branch
    %15 = sbr.rel (%p13) target = $region8
  $region5: #{basic_block.1} parent=0 // loop_body
    %s17 = ssub.s32 %s12, 1
    %s18 = ssub.s32 %s12, 2
    %s19 = sadd.s32 %s12, 1
    %s20 = ssub.s32 %s12, %s19
    %p21 = scmp.eq.s32.totalorder %s20, 0
    %s23 = sadd.s32 %s22, 1
    %s24 = scalar_select %p21, %s22, %s23
    %p27 = pneg %p21
    %p28 = scmp.eq.s32.totalorder %s12, 1
    %p29 = por %p27, %p28
    %p30 = scmp.ne.s32.totalorder %s22, %s25
    %p31 = scmp.eq.s32.totalorder %s12, 0
    %p32 = por %p30, %p31
    %p33 = scmp.ne.s32.totalorder %s22, %s25
    %p34 = scmp.eq.s32.totalorder %s17, 1
    %p35 = por %p33, %p34
    %p36 = scmp.ne.s32.totalorder %s25, %s26
    %p37 = scmp.eq.s32.totalorder %s17, 0
    %p38 = por %p36, %p37
    %p39 = scmp.ne.s32.totalorder %s25, %s26
    %p40 = scmp.eq.s32.totalorder %s18, 1
    %p41 = por %p39, %p40
    %p43 = scmp.ne.s32.totalorder %s26, %s42
    %p44 = scmp.eq.s32.totalorder %s18, 0
    %p45 = por %p43, %p44
    %s47 = sadd.s32 %s46, 1
    %p50 = scmp.eq.s32.totalorder %s12, 1
    %p51 = scmp.ne.s32.totalorder %s46, %s48
    %p52 = scmp.eq.s32.totalorder %s12, 0
    %p53 = por %p51, %p52
    %p54 = scmp.ne.s32.totalorder %s46, %s48
    %p55 = scmp.eq.s32.totalorder %s17, 1
    %p56 = por %p54, %p55
    %p57 = scmp.ne.s32.totalorder %s48, %s49
    %p58 = scmp.eq.s32.totalorder %s17, 0
    %p59 = por %p57, %p58
    %p60 = scmp.ne.s32.totalorder %s48, %s49
    %p61 = scmp.eq.s32.totalorder %s18, 1
    %p62 = por %p60, %p61
    %p64 = scmp.ne.s32.totalorder %s49, %s63
    %p65 = scmp.eq.s32.totalorder %s18, 0
    %p66 = por %p64, %p65
    %s68 = sadd.s32 %s67, 1
    %p71 = scmp.eq.s32.totalorder %s12, 1
    %p72 = scmp.ne.s32.totalorder %s67, %s69
    %p73 = scmp.eq.s32.totalorder %s12, 0
    %p74 = por %p72, %p73
    %p75 = scmp.ne.s32.totalorder %s67, %s69
    %p76 = scmp.eq.s32.totalorder %s17, 1
    %p77 = por %p75, %p76
    %p78 = scmp.ne.s32.totalorder %s69, %s70
    %p79 = scmp.eq.s32.totalorder %s17, 0
    %p80 = por %p78, %p79
    %p81 = scmp.ne.s32.totalorder %s69, %s70
    %p82 = scmp.eq.s32.totalorder %s18, 1
    %p83 = por %p81, %p82
    %p85 = scmp.ne.s32.totalorder %s70, %s84
    %p86 = scmp.eq.s32.totalorder %s18, 0
    %p87 = por %p85, %p86
    %s89 = sadd.s32 %s88, 1
    %p92 = scmp.eq.s32.totalorder %s12, 1
    %p93 = scmp.ne.s32.totalorder %s88, %s90
    %p94 = scmp.eq.s32.totalorder %s12, 0
    %p95 = por %p93, %p94
    %p96 = scmp.ne.s32.totalorder %s88, %s90
    %p97 = scmp.eq.s32.totalorder %s17, 1
    %p98 = por %p96, %p97
    %p99 = scmp.ne.s32.totalorder %s90, %s91
    %p100 = scmp.eq.s32.totalorder %s17, 0
    %p101 = por %p99, %p100
    %p102 = scmp.ne.s32.totalorder %s90, %s91
    %p103 = scmp.eq.s32.totalorder %s18, 1
    %p104 = por %p102, %p103
    %p106 = scmp.ne.s32.totalorder %s91, %s105
    %p107 = scmp.eq.s32.totalorder %s18, 0
    %p108 = por %p106, %p107
    %s110 = sadd.s32 %s109, 1
    %p113 = scmp.eq.s32.totalorder %s12, 1
    %p114 = scmp.ne.s32.totalorder %s109, %s111
    %p115 = scmp.eq.s32.totalorder %s12, 0
    %p116 = por %p114, %p115
    %p117 = scmp.ne.s32.totalorder %s109, %s111
    %p118 = scmp.eq.s32.totalorder %s17, 1
    %p119 = por %p117, %p118
    %p120 = scmp.ne.s32.totalorder %s111, %s112
    %p121 = scmp.eq.s32.totalorder %s17, 0
    %p122 = por %p120, %p121
    %p123 = scmp.ne.s32.totalorder %s111, %s112
    %p124 = scmp.eq.s32.totalorder %s18, 1
    %p125 = por %p123, %p124
    %p127 = scmp.ne.s32.totalorder %s112, %s126
    %p128 = scmp.eq.s32.totalorder %s18, 0
    %p129 = por %p127, %p128
    %s131 = sadd.s32 %s130, 1
    %p134 = scmp.eq.s32.totalorder %s12, 1
    %p135 = scmp.ne.s32.totalorder %s130, %s132
    %p136 = scmp.eq.s32.totalorder %s12, 0
    %p137 = por %p135, %p136
    %p138 = scmp.ne.s32.totalorder %s130, %s132
    %p139 = scmp.eq.s32.totalorder %s17, 1
    %p140 = por %p138, %p139
    %p141 = scmp.ne.s32.totalorder %s132, %s133
    %p142 = scmp.eq.s32.totalorder %s17, 0
    %p143 = por %p141, %p142
    %p144 = scmp.ne.s32.totalorder %s132, %s133
    %p145 = scmp.eq.s32.totalorder %s18, 1
    %p146 = por %p144, %p145
    %p148 = scmp.ne.s32.totalorder %s133, %s147
    %p149 = scmp.eq.s32.totalorder %s18, 0
    %p150 = por %p148, %p149
    %s151 = ssub.s32 %s12, %s19
    %p152 = scmp.eq.s32.totalorder %s151, 0
    %s154 = sadd.s32 %s153, 1
    %s155 = scalar_select %p152, %s153, %s154
    %p158 = pneg %p152
    %p159 = scmp.eq.s32.totalorder %s12, 1
    %p160 = por %p158, %p159
    %p161 = scmp.ne.s32.totalorder %s153, %s156
    %p162 = scmp.eq.s32.totalorder %s12, 0
    %p163 = por %p161, %p162
    %p164 = scmp.ne.s32.totalorder %s153, %s156
    %p165 = scmp.eq.s32.totalorder %s17, 1
    %p166 = por %p164, %p165
    %p167 = scmp.ne.s32.totalorder %s156, %s157
    %p168 = scmp.eq.s32.totalorder %s17, 0
    %p169 = por %p167, %p168
    %p170 = scmp.ne.s32.totalorder %s156, %s157
    %p171 = scmp.eq.s32.totalorder %s18, 1
    %p172 = por %p170, %p171
    %p174 = scmp.ne.s32.totalorder %s157, %s173
    %p175 = scmp.eq.s32.totalorder %s18, 0
    %p176 = por %p174, %p175
    %p177 = scmp.le.s32.totalorder 1, %s12
    %p178 = scmp.lt.s32.totalorder %s12, 3
    %p179 = pnand %p177, %p178
    %p180 = pneg %p179
    // Predicated region
    $region9: #{basic_block.1} parent=5 // pred_check
      _
    $region10: #{basic_block.1} parent=5 // pred_check_branch
      %182 = sbr.rel (%p179) target = $region12
    $region11: #{basic_block.1} parent=5 // pred_region
      %s183 = ssub.s32 %s12, 1
      // Predicated region
      $region13: #{basic_block.1} parent=11 // pred_check
        %p184 = pneg %p59
      $region14: #{basic_block.1} parent=11 // pred_check_branch
        %186 = sbr.rel (%p184) target = $region16
      $region15: #{basic_block.1} parent=11 // pred_region
        _
      $region16: #{basic_block.1} parent=11 // pred_fallthru
        _
      // Predicated region
      $region17: #{basic_block.1} parent=11 // pred_check
        %p187 = pneg %p80
      $region18: #{basic_block.1} parent=11 // pred_check_branch
        %189 = sbr.rel (%p187) target = $region20
      $region19: #{basic_block.1} parent=11 // pred_region
        _
      $region20: #{basic_block.1} parent=11 // pred_fallthru
        _
      // Predicated region
      $region21: #{basic_block.1} parent=11 // pred_check
        %p190 = pneg %p101
      $region22: #{basic_block.1} parent=11 // pred_check_branch
        %192 = sbr.rel (%p190) target = $region24
      $region23: #{basic_block.1} parent=11 // pred_region
        _
      $region24: #{basic_block.1} parent=11 // pred_fallthru
        _
      // Predicated region
      $region25: #{basic_block.1} parent=11 // pred_check
        %p193 = pneg %p122
      $region26: #{basic_block.1} parent=11 // pred_check_branch
        %195 = sbr.rel (%p193) target = $region28
      $region27: #{basic_block.1} parent=11 // pred_region
        _
      $region28: #{basic_block.1} parent=11 // pred_fallthru
        _
      // Predicated region
      $region29: #{basic_block.1} parent=11 // pred_check
        %p196 = pneg %p143
      $region30: #{basic_block.1} parent=11 // pred_check_branch
        %198 = sbr.rel (%p196) target = $region32
      $region31: #{basic_block.1} parent=11 // pred_region
        _
      $region32: #{basic_block.1} parent=11 // pred_fallthru
        _
    $region12: #{basic_block.1} parent=5 // pred_fallthru
      _
    %p199 = scmp.lt.s32.totalorder %s12, 2
    // Predicated region
    $region33: #{basic_block.1} parent=5 // pred_check
      %p200 = pneg %p199
    $region34: #{basic_block.1} parent=5 // pred_check_branch
      %202 = sbr.rel (%p200) target = $region36
    $region35: #{basic_block.1} parent=5 // pred_region
      // Predicated region
      $region37: #{basic_block.1} parent=35 // pred_check
        %p203 = pneg %p32
      $region38: #{basic_block.1} parent=35 // pred_check_branch
        %205 = sbr.rel (%p203) target = $region40
      $region39: #{basic_block.1} parent=35 // pred_region
        %p206 = scmp.lt.s32.totalorder %s12, 1
        %s207 = scalar_select %p206, %s12, 1
        %s208 = smul.addr %s207, 2
        %s209 = smul.addr %s208, 4
        %s210 = scalar_lea.vmem %s0, %s209
      $region40: #{basic_block.1} parent=35 // pred_fallthru
        _
    $region36: #{basic_block.1} parent=5 // pred_fallthru
      _
    %p211 = scmp.le.s32.totalorder 1, %s12
    %p212 = scmp.lt.s32.totalorder %s12, 3
    %p213 = pnand %p211, %p212
    %p214 = pneg %p213
    // Predicated region
    $region41: #{basic_block.1} parent=5 // pred_check
      _
    $region42: #{basic_block.1} parent=5 // pred_check_branch
      %216 = sbr.rel (%p213) target = $region44
    $region43: #{basic_block.1} parent=5 // pred_region
      %s217 = ssub.s32 %s12, 1
      %p218 = scmp.lt.s32.totalorder %s17, 1
      %s219 = scalar_select %p218, %s17, 1
      %s220 = smul.addr %s219, 2
      %s221 = smul.addr %s220, 4
      %s222 = scalar_lea.vmem %s0, %s221
      %p223 = pneg %p38
      %p224 = pneg %p35
      %p225 = pneg %p59
      %p226 = pneg %p56
      %p227 = pneg %p80
      %p228 = pneg %p77
      %p229 = pneg %p101
      %p230 = pneg %p98
      %p231 = pneg %p122
      %p232 = pneg %p119
      %p233 = pneg %p143
      %p234 = pneg %p140
      %p235 = pneg %p169
      %p236 = pneg %p166
      %p237 = scmp.lt.s32.totalorder %s17, 1
      %s238 = scalar_select %p237, %s17, 1
      %s239 = smul.addr %s238, 2
      %s240 = smul.addr %s239, 4
      %s241 = scalar_lea.vmem %s6, %s240
      %p242 = scmp.lt.s32.totalorder %s17, 1
      %s243 = scalar_select %p242, %s17, 1
      %s244 = smul.addr %s243, 2
      %s245 = smul.addr %s244, 4
      %s246 = scalar_lea.vmem %s0, %s245
      %p247 = scmp.lt.s32.totalorder %s17, 1
      %s248 = scalar_select %p247, %s17, 1
      %s249 = smul.addr %s248, 2
      %s250 = smul.addr %s249, 4
      %s251 = scalar_lea.vmem %s6, %s250
      %vm252 = vcmask 134144
      %253 = vst.msk [vmem:[#allocation2] sm:$0xf] %vm252, 0.0
      %vm254 = vcmask 273544
      %255 = vst.msk [vmem:[#allocation2 + $0x8] sm:$0xf] %vm254, 0.0
      %v256 = vld [vmem:[%s246] sm:$0xff]
      %v257 = vld [vmem:[%s5] sm:$0xf]
      %259 = vrot.lane.b32.xlu0 %v256, 17
      %v260 = vpop.permute.xlu0 %259
      %v261 = vrot.slane %v260, 4
      %vm262 = vcmask 138240
      %v263 = vsel %vm262, %v261, %v260
      %vm266 = vcmask 1043592
      %vm267 = vcmask 1047556
      %vm268 = vmor %vm267, %vm266
      %269 = vst.msk [vmem:[#allocation2] sm:$0xff] %vm268, %v263
      %270 = vst.msk [vmem:[#allocation2 + $0x8] sm:$0xf] %vm252, %v261
      %v271 = vld [vmem:[#allocation2] sm:$0xff]
      %v273 = vlaneseq
      %v274 = vshrl.u32 %v273, 7
      %v275 = vsub.s32 0, %v274
      %v276 = vrot.slane %v257, %v275
      %v277 = vlaneseq
      %v278 = vshrl.u32 %v277, 7
      %v279 = vsub.s32 2, %v278
      %v280 = vrot.slane %v257, %v279
      %v283 = vlaneseq
      %v284 = vshrl.u32 %v283, 7
      %v285 = vsub.s32 0, %v284
      %v286 = vrot.slane %v276, %v285
      %v287 = vlaneseq
      %v288 = vshrl.u32 %v287, 7
      %v289 = vsub.s32 0, %v288
      %v290 = vrot.slane %v280, %v289
      %v293 = vcombine.low %v286, %v290
      %v295 = vmul.f32 %v271, %v293
      %v297 = vcombine.high %v295, %v295
      %299 = vst [vmem:[#allocation3] sm:$0xf] %v295
      %300 = vst [vmem:[#allocation3 + $0x8] sm:$0xf] %v297
      %v301 = vld [vmem:[#allocation2] sm:$0xff]
      %v302 = vld [vmem:[#allocation2 + $0x8] sm:$0xf]
      %v305 = vcombine.low %v301, %v301
      %v306 = vcombine.low %v302, %v302
      %307 = vrot.lane.b32.xlu0 %v305, 127
      %v308 = vpop.permute.xlu0 %307
      %309 = vrot.lane.b32.xlu0 %v301, 127
      %v310 = vpop.permute.xlu0 %309
      %311 = vrot.lane.b32.xlu0 %v306, 127
      %v312 = vpop.permute.xlu0 %311
      %vm313 = vcmask 1039360
      %v314 = vsel %vm313, %v308, %v310
      %v315 = vsel %vm313, %v310, %v312
      %318 = vst [vmem:[#allocation3] sm:$0xf0] %v314
      %319 = vst [vmem:[#allocation3 + $0x8] sm:$0xf0] %v315
      %v320 = vld [vmem:[#allocation2] sm:$0xff]
      %v321 = vld [vmem:[#allocation2 + $0x8] sm:$0xf]
      %v322 = vlaneseq
      %v323 = vshrl.u32 %v322, 7
      %v324 = vsub.s32 1, %v323
      %v325 = vrot.slane %v257, %v324
      %v326 = vlaneseq
      %v327 = vshrl.u32 %v326, 7
      %v328 = vsub.s32 3, %v327
      %v329 = vrot.slane %v257, %v328
      %v332 = vlaneseq
      %v333 = vshrl.u32 %v332, 7
      %v334 = vsub.s32 1, %v333
      %v335 = vrot.slane %v325, %v334
      %v336 = vlaneseq
      %v337 = vshrl.u32 %v336, 7
      %v338 = vsub.s32 1, %v337
      %v339 = vrot.slane %v329, %v338
      %v342 = vcombine.low %v335, %v339
      %343 = vrot.lane.b32.xlu0 %v342, 2
      %v344 = vpop.permute.xlu0 %343
      %v345 = vrot.slane %v344, 4
      %vm346 = vcmask 15360
      %v347 = vsel %vm346, %v345, %v344
      %v350 = vmul.f32 %v320, %v347
      %v351 = vmul.f32 %v321, %v345
      %v354 = vcombine.high %v350, %v350
      %355 = vrot.lane.b32.xlu0 %v350, 126
      %v356 = vpop.permute.xlu0 %355
      %357 = vrot.lane.b32.xlu0 %v354, 126
      %v358 = vpop.permute.xlu0 %357
      %359 = vrot.lane.b32.xlu0 %v351, 126
      %v360 = vpop.permute.xlu0 %359
      %vm361 = vcmask 1031168
      %v362 = vsel %vm361, %v356, %v358
      %v363 = vsel %vm361, %v358, %v360
      %366 = vst [vmem:[#allocation3 + $0x10] sm:$0xf] %v362
      %367 = vst [vmem:[#allocation3 + $0x18] sm:$0xf] %v363
      %v368 = vld [vmem:[#allocation2] sm:$0xff]
      %v369 = vld [vmem:[#allocation2 + $0x8] sm:$0xf]
      %370 = vrot.lane.b32.xlu0 %v293, 16
      %v371 = vpop.permute.xlu0 %370
      %v372 = vrot.slane %v371, 4
      %vm373 = vcmask 130048
      %v374 = vsel %vm373, %v372, %v371
      %v377 = vmul.f32 %v368, %v374
      %v378 = vmul.f32 %v369, %v372
      %v381 = vcombine.low %v377, %v377
      %v382 = vcombine.low %v378, %v378
      %383 = vrot.lane.b32.xlu0 %v381, 112
      %v384 = vpop.permute.xlu0 %383
      %385 = vrot.lane.b32.xlu0 %v377, 112
      %v386 = vpop.permute.xlu0 %385
      %387 = vrot.lane.b32.xlu0 %v382, 112
      %v388 = vpop.permute.xlu0 %387
      %vm389 = vcmask 916480
      %v390 = vsel %vm389, %v384, %v386
      %v391 = vsel %vm389, %v386, %v388
      %394 = vst [vmem:[#allocation3 + $0x10] sm:$0xf0] %v390
      %395 = vst [vmem:[#allocation3 + $0x18] sm:$0xf0] %v391
      %v396 = vld [vmem:[#allocation2] sm:$0xff]
      %v397 = vld [vmem:[#allocation2 + $0x8] sm:$0xf]
      %v400 = vcombine.high %v396, %v396
      %401 = vrot.lane.b32.xlu0 %v396, 111
      %v402 = vpop.permute.xlu0 %401
      %403 = vrot.lane.b32.xlu0 %v400, 111
      %v404 = vpop.permute.xlu0 %403
      %405 = vrot.lane.b32.xlu0 %v397, 111
      %v406 = vpop.permute.xlu0 %405
      %vm407 = vcmask 908288
      %v408 = vsel %vm407, %v402, %v404
      %v409 = vsel %vm407, %v404, %v406
      %412 = vst [vmem:[#allocation3 + $0x20] sm:$0xf] %v408
      %413 = vst [vmem:[#allocation3 + $0x28] sm:$0xf] %v409
      %v414 = vld [vmem:[#allocation2] sm:$0xff]
      %v415 = vld [vmem:[#allocation2 + $0x8] sm:$0xf]
      %416 = vrot.lane.b32.xlu0 %v342, 18
      %v417 = vpop.permute.xlu0 %416
      %v418 = vrot.slane %v417, 4
      %vm419 = vcmask 146432
      %v420 = vsel %vm419, %v418, %v417
      %v423 = vmul.f32 %v414, %v420
      %v424 = vmul.f32 %v415, %v418
      %v427 = vcombine.low %v423, %v423
      %v428 = vcombine.low %v424, %v424
      %429 = vrot.lane.b32.xlu0 %v427, 110
      %v430 = vpop.permute.xlu0 %429
      %431 = vrot.lane.b32.xlu0 %v423, 110
      %v432 = vpop.permute.xlu0 %431
      %433 = vrot.lane.b32.xlu0 %v428, 110
      %v434 = vpop.permute.xlu0 %433
      %vm435 = vcmask 900096
      %v436 = vsel %vm435, %v430, %v432
      %v437 = vsel %vm435, %v432, %v434
      %440 = vst [vmem:[#allocation3 + $0x20] sm:$0xf0] %v436
      %441 = vst [vmem:[#allocation3 + $0x28] sm:$0xf0] %v437
      %v442 = vld [vmem:[#allocation2] sm:$0xff]
      %v443 = vld [vmem:[#allocation2 + $0x8] sm:$0xf]
      %444 = vrot.lane.b32.xlu0 %v293, 32
      %v445 = vpop.permute.xlu0 %444
      %v446 = vrot.slane %v445, 4
      %vm447 = vcmask 261120
      %v448 = vsel %vm447, %v446, %v445
      %v451 = vmul.f32 %v442, %v448
      %v452 = vmul.f32 %v443, %v446
      %v455 = vcombine.high %v451, %v451
      %456 = vrot.lane.b32.xlu0 %v451, 96
      %v457 = vpop.permute.xlu0 %456
      %458 = vrot.lane.b32.xlu0 %v455, 96
      %v459 = vpop.permute.xlu0 %458
      %460 = vrot.lane.b32.xlu0 %v452, 96
      %v461 = vpop.permute.xlu0 %460
      %vm462 = vcmask 785408
      %v463 = vsel %vm462, %v457, %v459
      %v464 = vsel %vm462, %v459, %v461
      %467 = vst [vmem:[#allocation3 + $0x30] sm:$0xf] %v463
      %468 = vst [vmem:[#allocation3 + $0x38] sm:$0xf] %v464
      %v469 = vld [vmem:[#allocation2] sm:$0xff]
      %v470 = vld [vmem:[#allocation2 + $0x8] sm:$0xf]
      %v473 = vcombine.low %v469, %v469
      %v474 = vcombine.low %v470, %v470
      %475 = vrot.lane.b32.xlu0 %v473, 95
      %v476 = vpop.permute.xlu0 %475
      %477 = vrot.lane.b32.xlu0 %v469, 95
      %v478 = vpop.permute.xlu0 %477
      %479 = vrot.lane.b32.xlu0 %v474, 95
      %v480 = vpop.permute.xlu0 %479
      %vm481 = vcmask 777216
      %v482 = vsel %vm481, %v476, %v478
      %v483 = vsel %vm481, %v478, %v480
      %486 = vst [vmem:[#allocation3 + $0x30] sm:$0xf0] %v482
      %487 = vst [vmem:[#allocation3 + $0x38] sm:$0xf0] %v483
      %v488 = vld [vmem:[#allocation2] sm:$0xff]
      %v489 = vld [vmem:[#allocation2 + $0x8] sm:$0xf]
      %490 = vrot.lane.b32.xlu0 %v342, 34
      %v491 = vpop.permute.xlu0 %490
      %v492 = vrot.slane %v491, 4
      %vm493 = vcmask 277504
      %v494 = vsel %vm493, %v492, %v491
      %v497 = vmul.f32 %v488, %v494
      %v498 = vmul.f32 %v489, %v492
      %v501 = vcombine.high %v497, %v497
      %502 = vrot.lane.b32.xlu0 %v497, 94
      %v503 = vpop.permute.xlu0 %502
      %504 = vrot.lane.b32.xlu0 %v501, 94
      %v505 = vpop.permute.xlu0 %504
      %506 = vrot.lane.b32.xlu0 %v498, 94
      %v507 = vpop.permute.xlu0 %506
      %vm508 = vcmask 769024
      %v509 = vsel %vm508, %v503, %v505
      %v510 = vsel %vm508, %v505, %v507
      %513 = vst [vmem:[#allocation3 + $0x40] sm:$0xf] %v509
      %514 = vst [vmem:[#allocation3 + $0x48] sm:$0xf] %v510
      %v515 = vld [vmem:[%s1] sm:$0xf]
      %v516 = vld [vmem:[#allocation3] sm:$0xff]
      %v517 = vld [vmem:[#allocation3 + $0x8] sm:$0xff]
      %v518 = vld [vmem:[#allocation3 + $0x10] sm:$0xff]
      %v519 = vld [vmem:[#allocation3 + $0x18] sm:$0xff]
      %v520 = vld [vmem:[#allocation3 + $0x20] sm:$0xff]
      %v521 = vld [vmem:[#allocation3 + $0x28] sm:$0xff]
      %v522 = vld [vmem:[#allocation3 + $0x30] sm:$0xff]
      %v523 = vld [vmem:[#allocation3 + $0x38] sm:$0xff]
      %v524 = vld [vmem:[#allocation3 + $0x40] sm:$0xf]
      %v525 = vld [vmem:[#allocation3 + $0x48] sm:$0xf]
      %v526 = vld [vmem:[%s2] sm:$0xf]
      %528 = vset.pattern.permute.xlu0 0
      %529 = vperm.xlu0 %528, %v526
      %v530 = vpop.permute.xlu0 %529
      %vm532 = vcmask 293888
      %v534 = vsel %vm532, %v515, 0
      %vm536 = vcmask 1043456
      %v538 = vsel %vm536, %v524, 0
      %v541 = vsel %vm536, %v525, 0
      %543 = vmatprep.subr.mxu0 %v517
      %544 = vmatpush1.msra.mxu0 %v516
      %545 = vmatprep.subr.mxu0 %v519
      %546 = vmatpush1.msra.mxu0 %v518
      %547 = vmatprep.subr.mxu0 %v521
      %548 = vmatpush1.msra.mxu0 %v520
      %549 = vmatprep.subr.mxu0 %v523
      %550 = vmatpush1.msra.mxu0 %v522
      %551 = vmatprep.subr.mxu0 %v541
      %552 = vmatpush1.msra.mxu0 %v538
      %553 = vmatprep.subr.mxu0 0.0
      %554 = vmatpush1.msra.mxu0 0.0
      %555 = vmatprep.subr.mxu0 0.0
      %556 = vmatpush1.msra.mxu0 0.0
      %557 = vmatprep.subr.mxu0 0.0
      %558 = vmatpush1.msra.mxu0 0.0
      %559 = vmatprep.subr.mxu0 0.0
      %560 = vmatpush1.msra.mxu0 0.0
      %561 = vmatprep.subr.mxu0 0.0
      %562 = vmatpush1.msra.mxu0 0.0
      %563 = vmatprep.subr.mxu0 0.0
      %564 = vmatpush1.msra.mxu0 0.0
      %565 = vmatprep.subr.mxu0 0.0
      %566 = vmatpush1.msra.mxu0 0.0
      %567 = vmatprep.subr.mxu0 0.0
      %568 = vmatpush1.msra.mxu0 0.0
      %569 = vmatprep.subr.mxu0 0.0
      %570 = vmatpush1.msra.mxu0 0.0
      %571 = vmatprep.subr.mxu0 0.0
      %572 = vmatpush1.msra.mxu0 0.0
      %573 = vmatprep.subr.mxu0 0.0
      %574 = vmatpush1.msra.mxu0 0.0
      %575 = vmatprep.subr.mxu0 0.0
      %576 = vmatpush1.msra.mxu0 0.0
      %577 = vmatprep.subr.mxu0 0.0
      %578 = vmatpush1.msra.mxu0 0.0
      %579 = vmatprep.subr.mxu0 0.0
      %580 = vmatpush1.msra.mxu0 0.0
      %581 = vmatprep.subr.mxu0 0.0
      %582 = vmatpush1.msra.mxu0 0.0
      %583 = vmatprep.subr.mxu0 0.0
      %584 = vmatpush1.msra.mxu0 0.0
      %585 = vmatprep.subr.mxu0 0.0
      %586 = vmatpush1.msra.mxu0 0.0
      %587 = vmatprep.subr.mxu0 0.0
      %588 = vmatpush1.msra.mxu0 0.0
      %589 = vmatprep.subr.mxu0 0.0
      %590 = vmatpush1.msra.mxu0 0.0
      %591 = vmatprep.subr.mxu0 0.0
      %592 = vmatpush1.msra.mxu0 0.0
      %593 = vmatprep.subr.mxu0 0.0
      %594 = vmatpush1.msra.mxu0 0.0
      %595 = vmatprep.subr.mxu0 0.0
      %596 = vmatpush1.msra.mxu0 0.0
      %597 = vmatprep.subr.mxu0 0.0
      %598 = vmatpush1.msra.mxu0 0.0
      %599 = vmatprep.subr.mxu0 0.0
      %600 = vmatpush1.msra.mxu0 0.0
      %601 = vmatprep.subr.mxu0 0.0
      %602 = vmatpush1.msra.mxu0 0.0
      %603 = vmatprep.subr.mxu0 0.0
      %604 = vmatpush1.msra.mxu0 0.0
      %605 = vmatprep.subr.mxu0 0.0
      %606 = vmatpush1.msra.mxu0 0.0
      %607 = vmatprep.mubr.f32.mxu0 0.0
      %608 = vmatmul.mubr.f32.gmra.mrb[0].mxu0 %v534
      %v609 = vpop.f32.mrb[0].mxu0
      %v610 = vadd.f32 %v530, %v609
      %v611 = vpop.f32.mrb[0].mxu0
      %v612 = vadd.f32 %v530, %v611
      %613 = vdwg.mxu0
      %v614 = vmax.f32 %v610, 0.0
      %v615 = vmax.f32 %v612, 0.0
      %v618 = vcombine.low %v614, %v615
      %619 = vrot.lane.b32.xlu0 %v618, 17
      %v620 = vpop.permute.xlu0 %619
      %v621 = vrot.slane %v620, 4
      %v622 = vsel %vm262, %v621, %v620
      %625 = vst.msk [vmem:[#allocation2] sm:$0xff] %vm268, %v622
      %626 = vst.msk [vmem:[#allocation2 + $0x8] sm:$0xf] %vm252, %v621
      %v627 = vld [vmem:[#allocation2] sm:$0xff]
      %v628 = vmul.f32 %v627, %v293
      %v630 = vcombine.high %v628, %v628
      %632 = vst [vmem:[#allocation3] sm:$0xf] %v628
      %633 = vst [vmem:[#allocation3 + $0x8] sm:$0xf] %v630
      %v634 = vld [vmem:[#allocation2] sm:$0xff]
      %v635 = vld [vmem:[#allocation2 + $0x8] sm:$0xf]
      %v638 = vcombine.low %v634, %v634
      %v639 = vcombine.low %v635, %v635
      %640 = vrot.lane.b32.xlu0 %v638, 127
      %v641 = vpop.permute.xlu0 %640
      %642 = vrot.lane.b32.xlu0 %v634, 127
      %v643 = vpop.permute.xlu0 %642
      %644 = vrot.lane.b32.xlu0 %v639, 127
      %v645 = vpop.permute.xlu0 %644
      %v646 = vsel %vm313, %v641, %v643
      %v647 = vsel %vm313, %v643, %v645
      %650 = vst [vmem:[#allocation3] sm:$0xf0] %v646
      %651 = vst [vmem:[#allocation3 + $0x8] sm:$0xf0] %v647
      %v652 = vld [vmem:[#allocation2] sm:$0xff]
      %v653 = vld [vmem:[#allocation2 + $0x8] sm:$0xf]
      %v654 = vmul.f32 %v652, %v347
      %v655 = vmul.f32 %v653, %v345
      %v658 = vcombine.high %v654, %v654
      %659 = vrot.lane.b32.xlu0 %v654, 126
      %v660 = vpop.permute.xlu0 %659
      %661 = vrot.lane.b32.xlu0 %v658, 126
      %v662 = vpop.permute.xlu0 %661
      %663 = vrot.lane.b32.xlu0 %v655, 126
      %v664 = vpop.permute.xlu0 %663
      %v665 = vsel %vm361, %v660, %v662
      %v666 = vsel %vm361, %v662, %v664
      %669 = vst [vmem:[#allocation3 + $0x10] sm:$0xf] %v665
      %670 = vst [vmem:[#allocation3 + $0x18] sm:$0xf] %v666
      %v671 = vld [vmem:[#allocation2] sm:$0xff]
      %v672 = vld [vmem:[#allocation2 + $0x8] sm:$0xf]
      %v673 = vmul.f32 %v671, %v374
      %v674 = vmul.f32 %v672, %v372
      %v677 = vcombine.low %v673, %v673
      %v678 = vcombine.low %v674, %v674
      %679 = vrot.lane.b32.xlu0 %v677, 112
      %v680 = vpop.permute.xlu0 %679
      %681 = vrot.lane.b32.xlu0 %v673, 112
      %v682 = vpop.permute.xlu0 %681
      %683 = vrot.lane.b32.xlu0 %v678, 112
      %v684 = vpop.permute.xlu0 %683
      %v685 = vsel %vm389, %v680, %v682
      %v686 = vsel %vm389, %v682, %v684
      %689 = vst [vmem:[#allocation3 + $0x10] sm:$0xf0] %v685
      %690 = vst [vmem:[#allocation3 + $0x18] sm:$0xf0] %v686
      %v691 = vld [vmem:[#allocation2] sm:$0xff]
      %v692 = vld [vmem:[#allocation2 + $0x8] sm:$0xf]
      %v695 = vcombine.high %v691, %v691
      %696 = vrot.lane.b32.xlu0 %v691, 111
      %v697 = vpop.permute.xlu0 %696
      %698 = vrot.lane.b32.xlu0 %v695, 111
      %v699 = vpop.permute.xlu0 %698
      %700 = vrot.lane.b32.xlu0 %v692, 111
      %v701 = vpop.permute.xlu0 %700
      %v702 = vsel %vm407, %v697, %v699
      %v703 = vsel %vm407, %v699, %v701
      %706 = vst [vmem:[#allocation3 + $0x20] sm:$0xf] %v702
      %707 = vst [vmem:[#allocation3 + $0x28] sm:$0xf] %v703
      %v708 = vld [vmem:[#allocation2] sm:$0xff]
      %v709 = vld [vmem:[#allocation2 + $0x8] sm:$0xf]
      %v710 = vmul.f32 %v708, %v420
      %v711 = vmul.f32 %v709, %v418
      %v714 = vcombine.low %v710, %v710
      %v715 = vcombine.low %v711, %v711
      %716 = vrot.lane.b32.xlu0 %v714, 110
      %v717 = vpop.permute.xlu0 %716
      %718 = vrot.lane.b32.xlu0 %v710, 110
      %v719 = vpop.permute.xlu0 %718
      %720 = vrot.lane.b32.xlu0 %v715, 110
      %v721 = vpop.permute.xlu0 %720
      %v722 = vsel %vm435, %v717, %v719
      %v723 = vsel %vm435, %v719, %v721
      %726 = vst [vmem:[#allocation3 + $0x20] sm:$0xf0] %v722
      %727 = vst [vmem:[#allocation3 + $0x28] sm:$0xf0] %v723
      %v728 = vld [vmem:[#allocation2] sm:$0xff]
      %v729 = vld [vmem:[#allocation2 + $0x8] sm:$0xf]
      %v730 = vmul.f32 %v728, %v448
      %v731 = vmul.f32 %v729, %v446
      %v734 = vcombine.high %v730, %v730
      %735 = vrot.lane.b32.xlu0 %v730, 96
      %v736 = vpop.permute.xlu0 %735
      %737 = vrot.lane.b32.xlu0 %v734, 96
      %v738 = vpop.permute.xlu0 %737
      %739 = vrot.lane.b32.xlu0 %v731, 96
      %v740 = vpop.permute.xlu0 %739
      %v741 = vsel %vm462, %v736, %v738
      %v742 = vsel %vm462, %v738, %v740
      %745 = vst [vmem:[#allocation3 + $0x30] sm:$0xf] %v741
      %746 = vst [vmem:[#allocation3 + $0x38] sm:$0xf] %v742
      %v747 = vld [vmem:[#allocation2] sm:$0xff]
      %v748 = vld [vmem:[#allocation2 + $0x8] sm:$0xf]
      %v751 = vcombine.low %v747, %v747
      %v752 = vcombine.low %v748, %v748
      %753 = vrot.lane.b32.xlu0 %v751, 95
      %v754 = vpop.permute.xlu0 %753
      %755 = vrot.lane.b32.xlu0 %v747, 95
      %v756 = vpop.permute.xlu0 %755
      %757 = vrot.lane.b32.xlu0 %v752, 95
      %v758 = vpop.permute.xlu0 %757
      %v759 = vsel %vm481, %v754, %v756
      %v760 = vsel %vm481, %v756, %v758
      %763 = vst [vmem:[#allocation3 + $0x30] sm:$0xf0] %v759
      %764 = vst [vmem:[#allocation3 + $0x38] sm:$0xf0] %v760
      %v765 = vld [vmem:[#allocation2] sm:$0xff]
      %v766 = vld [vmem:[#allocation2 + $0x8] sm:$0xf]
      %v767 = vmul.f32 %v765, %v494
      %v768 = vmul.f32 %v766, %v492
      %v771 = vcombine.high %v767, %v767
      %772 = vrot.lane.b32.xlu0 %v767, 94
      %v773 = vpop.permute.xlu0 %772
      %774 = vrot.lane.b32.xlu0 %v771, 94
      %v775 = vpop.permute.xlu0 %774
      %776 = vrot.lane.b32.xlu0 %v768, 94
      %v777 = vpop.permute.xlu0 %776
      %v778 = vsel %vm508, %v773, %v775
      %v779 = vsel %vm508, %v775, %v777
      %782 = vst [vmem:[#allocation3 + $0x40] sm:$0xf] %v778
      %783 = vst [vmem:[#allocation3 + $0x48] sm:$0xf] %v779
      %v784 = vld [vmem:[%s3] sm:$0xf]
      %v785 = vld [vmem:[#allocation3] sm:$0xff]
      %v786 = vld [vmem:[#allocation3 + $0x8] sm:$0xff]
      %v787 = vld [vmem:[#allocation3 + $0x10] sm:$0xff]
      %v788 = vld [vmem:[#allocation3 + $0x18] sm:$0xff]
      %v789 = vld [vmem:[#allocation3 + $0x20] sm:$0xff]
      %v790 = vld [vmem:[#allocation3 + $0x28] sm:$0xff]
      %v791 = vld [vmem:[#allocation3 + $0x30] sm:$0xff]
      %v792 = vld [vmem:[#allocation3 + $0x38] sm:$0xff]
      %v793 = vld [vmem:[#allocation3 + $0x40] sm:$0xf]
      %v794 = vld [vmem:[#allocation3 + $0x48] sm:$0xf]
      %v795 = vld [vmem:[%s4] sm:$0xf]
      %797 = vset.pattern.permute.xlu0 0
      %798 = vperm.xlu0 %797, %v795
      %v799 = vpop.permute.xlu0 %798
      %v802 = vsel %vm532, %v784, 0
      %v805 = vsel %vm536, %v793, 0
      %v808 = vsel %vm536, %v794, 0
      %810 = vmatprep.subr.mxu0 %v786
      %811 = vmatpush1.msra.mxu0 %v785
      %812 = vmatprep.subr.mxu0 %v788
      %813 = vmatpush1.msra.mxu0 %v787
      %814 = vmatprep.subr.mxu0 %v790
      %815 = vmatpush1.msra.mxu0 %v789
      %816 = vmatprep.subr.mxu0 %v792
      %817 = vmatpush1.msra.mxu0 %v791
      %818 = vmatprep.subr.mxu0 %v808
      %819 = vmatpush1.msra.mxu0 %v805
      %820 = vmatprep.subr.mxu0 0.0
      %821 = vmatpush1.msra.mxu0 0.0
      %822 = vmatprep.subr.mxu0 0.0
      %823 = vmatpush1.msra.mxu0 0.0
      %824 = vmatprep.subr.mxu0 0.0
      %825 = vmatpush1.msra.mxu0 0.0
      %826 = vmatprep.subr.mxu0 0.0
      %827 = vmatpush1.msra.mxu0 0.0
      %828 = vmatprep.subr.mxu0 0.0
      %829 = vmatpush1.msra.mxu0 0.0
      %830 = vmatprep.subr.mxu0 0.0
      %831 = vmatpush1.msra.mxu0 0.0
      %832 = vmatprep.subr.mxu0 0.0
      %833 = vmatpush1.msra.mxu0 0.0
      %834 = vmatprep.subr.mxu0 0.0
      %835 = vmatpush1.msra.mxu0 0.0
      %836 = vmatprep.subr.mxu0 0.0
      %837 = vmatpush1.msra.mxu0 0.0
      %838 = vmatprep.subr.mxu0 0.0
      %839 = vmatpush1.msra.mxu0 0.0
      %840 = vmatprep.subr.mxu0 0.0
      %841 = vmatpush1.msra.mxu0 0.0
      %842 = vmatprep.subr.mxu0 0.0
      %843 = vmatpush1.msra.mxu0 0.0
      %844 = vmatprep.subr.mxu0 0.0
      %845 = vmatpush1.msra.mxu0 0.0
      %846 = vmatprep.subr.mxu0 0.0
      %847 = vmatpush1.msra.mxu0 0.0
      %848 = vmatprep.subr.mxu0 0.0
      %849 = vmatpush1.msra.mxu0 0.0
      %850 = vmatprep.subr.mxu0 0.0
      %851 = vmatpush1.msra.mxu0 0.0
      %852 = vmatprep.subr.mxu0 0.0
      %853 = vmatpush1.msra.mxu0 0.0
      %854 = vmatprep.subr.mxu0 0.0
      %855 = vmatpush1.msra.mxu0 0.0
      %856 = vmatprep.subr.mxu0 0.0
      %857 = vmatpush1.msra.mxu0 0.0
      %858 = vmatprep.subr.mxu0 0.0
      %859 = vmatpush1.msra.mxu0 0.0
      %860 = vmatprep.subr.mxu0 0.0
      %861 = vmatpush1.msra.mxu0 0.0
      %862 = vmatprep.subr.mxu0 0.0
      %863 = vmatpush1.msra.mxu0 0.0
      %864 = vmatprep.subr.mxu0 0.0
      %865 = vmatpush1.msra.mxu0 0.0
      %866 = vmatprep.subr.mxu0 0.0
      %867 = vmatpush1.msra.mxu0 0.0
      %868 = vmatprep.subr.mxu0 0.0
      %869 = vmatpush1.msra.mxu0 0.0
      %870 = vmatprep.subr.mxu0 0.0
      %871 = vmatpush1.msra.mxu0 0.0
      %872 = vmatprep.subr.mxu0 0.0
      %873 = vmatpush1.msra.mxu0 0.0
      %874 = vmatprep.mubr.f32.mxu0 0.0
      %875 = vmatmul.mubr.f32.gmra.mrb[0].mxu0 %v802
      %v876 = vpop.f32.mrb[0].mxu0
      %v877 = vadd.f32 %v799, %v876
      %v878 = vpop.f32.mrb[0].mxu0
      %v879 = vadd.f32 %v799, %v878
      %880 = vdwg.mxu0
      %v881 = vcombine.high %v256, %v256
      %v883 = vadd.f32 %v877, %v256
      %v884 = vadd.f32 %v879, %v881
      %v885 = vmax.f32 %v883, 0.0
      %v886 = vmax.f32 %v884, 0.0
      %v889 = vcombine.low %v885, %v886
      %891 = vst [vmem:[%s251] sm:$0xff] %v889
      %p892 = scmp.lt.s32.totalorder %s17, 1
      %s893 = scalar_select %p892, %s17, 1
      %s894 = smul.addr %s893, 2
      %s895 = smul.addr %s894, 4
      %s896 = scalar_lea.vmem %s6, %s895
      // Predicated region
      $region45: #{basic_block.1} parent=43 // pred_check
        %p897 = pneg %p166
      $region46: #{basic_block.1} parent=43 // pred_check_branch
        %899 = sbr.rel (%p897) target = $region48
      $region47: #{basic_block.1} parent=43 // pred_region
        _
      $region48: #{basic_block.1} parent=43 // pred_fallthru
        _
    $region44: #{basic_block.1} parent=5 // pred_fallthru
      _
    %p900 = scmp.le.s32.totalorder 2, %s12
    // Predicated region
    $region49: #{basic_block.1} parent=5 // pred_check
      %p901 = pneg %p900
    $region50: #{basic_block.1} parent=5 // pred_check_branch
      %903 = sbr.rel (%p901) target = $region52
    $region51: #{basic_block.1} parent=5 // pred_region
      %s904 = ssub.s32 %s12, 2
      // Predicated region
      $region53: #{basic_block.1} parent=51 // pred_check
        %p905 = pneg %p172
      $region54: #{basic_block.1} parent=51 // pred_check_branch
        %907 = sbr.rel (%p905) target = $region56
      $region55: #{basic_block.1} parent=51 // pred_region
        %p908 = scmp.lt.s32.totalorder %s18, 1
        %s909 = scalar_select %p908, %s18, 1
        %s910 = smul.addr %s909, 2
        %s911 = smul.addr %s910, 4
        %s912 = scalar_lea.vmem %s6, %s911
      $region56: #{basic_block.1} parent=51 // pred_fallthru
        _
    $region52: #{basic_block.1} parent=5 // pred_fallthru
      _
  $region6: #{basic_block.1} parent=0 // loop_footer
    %s16 = sadd.s32 1, %s12
  $region7: #{basic_block.1} parent=0 // loop_footer_branch
    %11 = sbr.rel target = $region3
  $region8: #{basic_block.1} parent=0 // loop_exit
    _

</llo_original>
